<compile_context>
chip_gen: v6e
topology: v6e:2x2x1
jax: 0.10.0
libtpu: 0.0.40
codegen_flags: <defaults>
</compile_context>

<pallas_src>
import functools

import jax
import jax.numpy as jnp
from jax.experimental import pallas as pl
from jax.experimental.pallas import tpu as pltpu


def _cond_bn_kernel(x_ref, w_ref, b_ref, o_ref, *, eps, inv_n):
    # x_ref/o_ref: (N, Cb, HWp)   w_ref/b_ref: (Cb, N) (channels on sublanes)
    n_batch = x_ref.shape[0]
    cb = x_ref.shape[1]

    # Pass 1: per-channel sum / sum-of-squares, one batch slice at a time so no
    # full-block f32 temporary is materialized. Lane (axis=-1) reduce per slice.
    def stats_body(n, carry):
        s1, s2 = carry
        xs = x_ref[n].astype(jnp.float32)                      # (Cb, HWp)
        s1 = s1 + jnp.sum(xs, axis=-1, keepdims=True)
        s2 = s2 + jnp.sum(xs * xs, axis=-1, keepdims=True)
        return s1, s2

    zeros = jnp.zeros((cb, 1), jnp.float32)
    s1, s2 = jax.lax.fori_loop(0, n_batch, stats_body, (zeros, zeros),
                               unroll=True)

    # Single-pass (biased) variance; clamp guards tiny negative rounding. Fine
    # for BN-scale activations; x stays in VMEM so a centered second pass could
    # be added later at zero extra HBM cost if precision ever demands it.
    mean = s1 * inv_n                                          # (Cb, 1)
    var = jnp.maximum(s2 * inv_n - mean * mean, 0.0)
    inv_std = jax.lax.rsqrt(var + eps)                         # (Cb, 1)

    # Fused per-(sample, channel) affine coefficients (tiny (Cb, N) arrays).
    w = w_ref[...].astype(jnp.float32)                         # (Cb, N)
    b = b_ref[...].astype(jnp.float32)                         # (Cb, N)
    scale_all = w * inv_std                                    # (Cb, N)
    shift_all = b - mean * scale_all                           # (Cb, N)
    lane_ids = jax.lax.broadcasted_iota(jnp.int32, (cb, n_batch), 1)

    # Pass 2: out = x * scale + shift, again one batch slice at a time,
    # re-reading x from VMEM (spare vld slots) instead of reusing a live xf.
    # The one-hot masked lane reduction extracts column n of the tiny (Cb, N)
    # coefficient arrays without any dynamic lane slicing.
    def out_body(n, carry):
        onehot = (lane_ids == n).astype(jnp.float32)           # (Cb, N)
        scale = jnp.sum(scale_all * onehot, axis=-1, keepdims=True)   # (Cb, 1)
        shift = jnp.sum(shift_all * onehot, axis=-1, keepdims=True)   # (Cb, 1)
        xs = x_ref[n].astype(jnp.float32)                      # (Cb, HWp)
        o_ref[n] = (xs * scale + shift).astype(o_ref.dtype)
        return carry

    jax.lax.fori_loop(0, n_batch, out_body, 0, unroll=True)


def _choose_channel_block(N, C, HWp, itemsize):
    """Channel block Cb: a few MiB per x block, sublane-aligned, >=4 grid steps
    when the channel count allows. Ragged last block is fine (per-channel stats
    are independent; padded channels are masked on writeback)."""
    per_c = max(1, N * HWp * itemsize)          # bytes of one channel of x
    target = 4 << 20                            # ~4 MiB per x block per buffer
    cb = target // per_c
    if C >= 32:
        cb = min(cb, C // 4)                    # keep >= 4 grid steps
    if cb >= C or C <= 8:
        return C
    cb = max(8, (cb // 8) * 8)                  # sublane-aligned blocked dim
    return int(min(cb, C))


def cond_batch_norm_2d(x, cats, ww, bw, wb, bb, *, eps=2e-5):
    """x: (N, C, H, W) NCHW; cats: (N, cond_dim).
    ww/wb: (cond_dim, C) (pre-transposed nn.Linear weights); bw/bb: (C,)."""
    N, C, H, W = x.shape
    HW = H * W
    itemsize = jnp.dtype(x.dtype).itemsize

    # Hoisted micro-GEMMs: far too small to be worth an in-kernel MXU pass.
    # Transposed to (C, N): channel block on sublanes, full batch on lanes.
    weight_t = (cats.astype(jnp.float32) @ ww.astype(jnp.float32)
                + bw.astype(jnp.float32)[None, :]).T           # (C, N)
    bias_t = (cats.astype(jnp.float32) @ wb.astype(jnp.float32)
              + bb.astype(jnp.float32)[None, :]).T             # (C, N)

    # Lane-dense spatial axis: zero-pad HW to a multiple of 128 (zeros do not
    # change the sums; inv_n below uses the true N*H*W).
    x3 = x.reshape(N, C, HW)
    pad = (-HW) % 128
    if pad:
        x3 = jnp.pad(x3, ((0, 0), (0, 0), (0, pad)))
    HWp = HW + pad

    cb = _choose_channel_block(N, C, HWp, itemsize)
    grid = (pl.cdiv(C, cb),)

    # Scoped VMEM: blocks are small, so the default is enough on v7x (64 MiB
    # physical -> 32 MiB); raise modestly on v5e/v6e for pipelining headroom.
    try:
        phys_vmem = int(pltpu.get_tpu_info().vmem_capacity_bytes)
    except Exception:
        phys_vmem = 64 << 20
    vmem_limit = max(32 << 20, min(phys_vmem // 2, 64 << 20))

    kernel = functools.partial(_cond_bn_kernel, eps=float(eps),
                               inv_n=1.0 / float(N * HW))

    cost = pl.CostEstimate(
        flops=5 * N * C * HW,
        transcendentals=C,
        bytes_accessed=2 * N * C * HWp * itemsize + 2 * C * N * 4,
    )

    out3 = pl.pallas_call(
        kernel,
        out_shape=jax.ShapeDtypeStruct((N, C, HWp), x.dtype),
        grid=grid,
        in_specs=[
            pl.BlockSpec((N, cb, HWp), lambda i: (0, i, 0)),
            pl.BlockSpec((cb, N), lambda i: (i, 0)),
            pl.BlockSpec((cb, N), lambda i: (i, 0)),
        ],
        out_specs=pl.BlockSpec((N, cb, HWp), lambda i: (0, i, 0)),
        compiler_params=pltpu.CompilerParams(
            dimension_semantics=("parallel",),
            vmem_limit_bytes=int(vmem_limit)),
        cost_estimate=cost,
    )(x3, weight_t, bias_t)

    if pad:
        out3 = out3[:, :, :HW]
    return out3.reshape(N, C, H, W)


def _reference(x, cats, ww, bw, wb, bb, eps=2e-5):
    mean = jnp.mean(x, axis=(0, 2, 3), keepdims=True)
    var = jnp.mean((x - mean) ** 2, axis=(0, 2, 3), keepdims=True)
    xn = (x - mean) * jax.lax.rsqrt(var + eps)
    weight = cats @ ww + bw                                    # (N, C)
    bias = cats @ wb + bb
    return xn * weight[:, :, None, None] + bias[:, :, None, None]


if __name__ == "__main__":
    # Small shapes consistent with the module: num_features=4, cond_dim=8.
    N, C, H, W = 2, 4, 16, 16
    COND_DIM = 8
    EPS = 2e-5

    key = jax.random.PRNGKey(0)
    kx, kc, kw, kb1, kb2 = jax.random.split(key, 5)

    x = jax.random.normal(kx, (N, C, H, W), dtype=jnp.float32)
    cats = jax.random.normal(kc, (N, COND_DIM), dtype=jnp.float32)

    # Deterministic parameter init mirroring CondBatchNorm2d.reset_parameters():
    #   bn_weight.weight ~ Normal(1, 0.02), bn_bias.weight = 0,
    #   linear biases keep default nn.Linear uniform(-1/sqrt(fan_in), ..) init.
    bound = 1.0 / jnp.sqrt(jnp.float32(COND_DIM))
    ww = 1.0 + 0.02 * jax.random.normal(kw, (COND_DIM, C), dtype=jnp.float32)
    bw = jax.random.uniform(kb1, (C,), minval=-bound, maxval=bound,
                            dtype=jnp.float32)
    wb = jnp.zeros((COND_DIM, C), dtype=jnp.float32)
    bb = jax.random.uniform(kb2, (C,), minval=-bound, maxval=bound,
                            dtype=jnp.float32)

    out = cond_batch_norm_2d(x, cats, ww, bw, wb, bb, eps=EPS)
    out = jax.block_until_ready(out)

    ref = _reference(x, cats, ww, bw, wb, bb, eps=EPS)
    assert out.shape == (N, C, H, W)
    assert jnp.allclose(out, ref, atol=1e-4, rtol=1e-4), "mismatch vs reference"

    print("KERNEL_OK")
</pallas_src>

<mosaic_0001>
module attributes {stable_mosaic.version = 11 : i64} {
  func.func @_cond_bn_kernel(%arg0: i32, %arg1: memref<2x4x256xf32, #tpu.memory_space<vmem>>, %arg2: memref<4x2xf32, #tpu.memory_space<vmem>>, %arg3: memref<4x2xf32, #tpu.memory_space<vmem>>, %arg4: memref<2x4x256xf32, #tpu.memory_space<vmem>>) attributes {dimension_semantics = [#tpu.dimension_semantics<parallel>], iteration_bounds = array<i64: 1>, scalar_prefetch = 0 : i64, scratch_operands = 0 : i64, tpu.core_type = #tpu.core_type<tc>, window_params = [{transform_indices = @transform_0, window_bounds = array<i64: 2, 4, 256>}, {transform_indices = @transform_1, window_bounds = array<i64: 4, 2>}, {transform_indices = @transform_2, window_bounds = array<i64: 4, 2>}, {transform_indices = @transform_3, window_bounds = array<i64: 2, 4, 256>}]} {
    %cst = arith.constant 0.000000e+00 : f32
    %0 = vector.broadcast %cst : f32 to vector<4x1xf32>
    %c0_i32 = arith.constant 0 : i32
    %1 = arith.index_cast %c0_i32 : i32 to index
    %c0 = arith.constant 0 : index
    %c0_0 = arith.constant 0 : index
    %2 = vector.load %arg1[%1, %c0, %c0_0] : memref<2x4x256xf32, #tpu.memory_space<vmem>>, vector<1x4x256xf32>
    %3 = vector.shape_cast %2 : vector<1x4x256xf32> to vector<4x256xf32>
    %cst_1 = arith.constant dense<0.000000e+00> : vector<4xf32>
    %4 = vector.multi_reduction <add>, %3, %cst_1 [1] : vector<4x256xf32> to vector<4xf32>
    %5 = vector.shape_cast %4 : vector<4xf32> to vector<4x1xf32>
    %6 = arith.addf %0, %5 : vector<4x1xf32>
    %7 = arith.mulf %3, %3 : vector<4x256xf32>
    %cst_2 = arith.constant dense<0.000000e+00> : vector<4xf32>
    %8 = vector.multi_reduction <add>, %7, %cst_2 [1] : vector<4x256xf32> to vector<4xf32>
    %9 = vector.shape_cast %8 : vector<4xf32> to vector<4x1xf32>
    %10 = arith.addf %0, %9 : vector<4x1xf32>
    %c1_i32 = arith.constant 1 : i32
    %11 = arith.index_cast %c1_i32 : i32 to index
    %c0_3 = arith.constant 0 : index
    %c0_4 = arith.constant 0 : index
    %12 = vector.load %arg1[%11, %c0_3, %c0_4] : memref<2x4x256xf32, #tpu.memory_space<vmem>>, vector<1x4x256xf32>
    %13 = vector.shape_cast %12 : vector<1x4x256xf32> to vector<4x256xf32>
    %cst_5 = arith.constant dense<0.000000e+00> : vector<4xf32>
    %14 = vector.multi_reduction <add>, %13, %cst_5 [1] : vector<4x256xf32> to vector<4xf32>
    %15 = vector.shape_cast %14 : vector<4xf32> to vector<4x1xf32>
    %16 = arith.addf %6, %15 : vector<4x1xf32>
    %17 = arith.mulf %13, %13 : vector<4x256xf32>
    %cst_6 = arith.constant dense<0.000000e+00> : vector<4xf32>
    %18 = vector.multi_reduction <add>, %17, %cst_6 [1] : vector<4x256xf32> to vector<4xf32>
    %19 = vector.shape_cast %18 : vector<4xf32> to vector<4x1xf32>
    %20 = arith.addf %10, %19 : vector<4x1xf32>
    %c2_i32 = arith.constant 2 : i32
    %cst_7 = arith.constant 0.001953125 : f32
    %21 = vector.broadcast %cst_7 : f32 to vector<4x1xf32>
    %22 = arith.mulf %16, %21 : vector<4x1xf32>
    %cst_8 = arith.constant 0.001953125 : f32
    %23 = vector.broadcast %cst_8 : f32 to vector<4x1xf32>
    %24 = arith.mulf %20, %23 : vector<4x1xf32>
    %25 = arith.mulf %22, %22 : vector<4x1xf32>
    %26 = arith.subf %24, %25 : vector<4x1xf32>
    %cst_9 = arith.constant 0.000000e+00 : f32
    %27 = vector.broadcast %cst_9 : f32 to vector<4x1xf32>
    %28 = arith.maximumf %26, %27 : vector<4x1xf32>
    %cst_10 = arith.constant 2.000000e-05 : f32
    %29 = vector.broadcast %cst_10 : f32 to vector<4x1xf32>
    %30 = arith.addf %28, %29 : vector<4x1xf32>
    %31 = math.rsqrt %30 : vector<4x1xf32>
    %c0_11 = arith.constant 0 : index
    %c0_12 = arith.constant 0 : index
    %32 = vector.load %arg2[%c0_11, %c0_12] : memref<4x2xf32, #tpu.memory_space<vmem>>, vector<4x2xf32>
    %c0_13 = arith.constant 0 : index
    %c0_14 = arith.constant 0 : index
    %33 = vector.load %arg3[%c0_13, %c0_14] : memref<4x2xf32, #tpu.memory_space<vmem>>, vector<4x2xf32>
    %34 = vector.broadcast %31 : vector<4x1xf32> to vector<4x2xf32>
    %35 = arith.mulf %32, %34 : vector<4x2xf32>
    %36 = vector.broadcast %22 : vector<4x1xf32> to vector<4x2xf32>
    %37 = arith.mulf %36, %35 : vector<4x2xf32>
    %38 = arith.subf %33, %37 : vector<4x2xf32>
    %39 = tpu.iota {dimensions = array<i32: 1>} : vector<4x2xi32>
    %c0_i32_15 = arith.constant 0 : i32
    %40 = vector.broadcast %c0_i32_15 : i32 to vector<4x2xi32>
    %41 = arith.cmpi eq, %39, %40 : vector<4x2xi32>
    %42 = arith.extui %41 : vector<4x2xi1> to vector<4x2xi32>
    %43 = arith.sitofp %42 : vector<4x2xi32> to vector<4x2xf32>
    %44 = arith.mulf %35, %43 : vector<4x2xf32>
    %cst_16 = arith.constant dense<0.000000e+00> : vector<4xf32>
    %45 = vector.multi_reduction <add>, %44, %cst_16 [1] : vector<4x2xf32> to vector<4xf32>
    %46 = vector.shape_cast %45 : vector<4xf32> to vector<4x1xf32>
    %47 = arith.mulf %38, %43 : vector<4x2xf32>
    %cst_17 = arith.constant dense<0.000000e+00> : vector<4xf32>
    %48 = vector.multi_reduction <add>, %47, %cst_17 [1] : vector<4x2xf32> to vector<4xf32>
    %49 = vector.shape_cast %48 : vector<4xf32> to vector<4x1xf32>
    %50 = arith.index_cast %c0_i32_15 : i32 to index
    %c0_18 = arith.constant 0 : index
    %c0_19 = arith.constant 0 : index
    %51 = vector.load %arg1[%50, %c0_18, %c0_19] : memref<2x4x256xf32, #tpu.memory_space<vmem>>, vector<1x4x256xf32>
    %52 = vector.shape_cast %51 : vector<1x4x256xf32> to vector<4x256xf32>
    %53 = vector.broadcast %46 : vector<4x1xf32> to vector<4x256xf32>
    %54 = arith.mulf %52, %53 : vector<4x256xf32>
    %55 = vector.broadcast %49 : vector<4x1xf32> to vector<4x256xf32>
    %56 = arith.addf %54, %55 : vector<4x256xf32>
    %57 = arith.index_cast %c0_i32_15 : i32 to index
    %c0_20 = arith.constant 0 : index
    %c0_21 = arith.constant 0 : index
    %58 = vector.load %arg4[%57, %c0_20, %c0_21] : memref<2x4x256xf32, #tpu.memory_space<vmem>>, vector<1x4x256xf32>
    %59 = vector.shape_cast %58 : vector<1x4x256xf32> to vector<4x256xf32>
    %60 = vector.shape_cast %56 : vector<4x256xf32> to vector<1x4x256xf32>
    tpu.vector_store %arg4[%57, %c0_20, %c0_21], %60 {strides = array<i32>} : memref<2x4x256xf32, #tpu.memory_space<vmem>>, vector<1x4x256xf32>,
    %c1_i32_22 = arith.constant 1 : i32
    %61 = vector.broadcast %c1_i32_22 : i32 to vector<4x2xi32>
    %62 = arith.cmpi eq, %39, %61 : vector<4x2xi32>
    %63 = arith.extui %62 : vector<4x2xi1> to vector<4x2xi32>
    %64 = arith.sitofp %63 : vector<4x2xi32> to vector<4x2xf32>
    %65 = arith.mulf %35, %64 : vector<4x2xf32>
    %cst_23 = arith.constant dense<0.000000e+00> : vector<4xf32>
    %66 = vector.multi_reduction <add>, %65, %cst_23 [1] : vector<4x2xf32> to vector<4xf32>
    %67 = vector.shape_cast %66 : vector<4xf32> to vector<4x1xf32>
    %68 = arith.mulf %38, %64 : vector<4x2xf32>
    %cst_24 = arith.constant dense<0.000000e+00> : vector<4xf32>
    %69 = vector.multi_reduction <add>, %68, %cst_24 [1] : vector<4x2xf32> to vector<4xf32>
    %70 = vector.shape_cast %69 : vector<4xf32> to vector<4x1xf32>
    %71 = arith.index_cast %c1_i32_22 : i32 to index
    %c0_25 = arith.constant 0 : index
    %c0_26 = arith.constant 0 : index
    %72 = vector.load %arg1[%71, %c0_25, %c0_26] : memref<2x4x256xf32, #tpu.memory_space<vmem>>, vector<1x4x256xf32>
    %73 = vector.shape_cast %72 : vector<1x4x256xf32> to vector<4x256xf32>
    %74 = vector.broadcast %67 : vector<4x1xf32> to vector<4x256xf32>
    %75 = arith.mulf %73, %74 : vector<4x256xf32>
    %76 = vector.broadcast %70 : vector<4x1xf32> to vector<4x256xf32>
    %77 = arith.addf %75, %76 : vector<4x256xf32>
    %78 = arith.index_cast %c1_i32_22 : i32 to index
    %c0_27 = arith.constant 0 : index
    %c0_28 = arith.constant 0 : index
    %79 = vector.load %arg4[%78, %c0_27, %c0_28] : memref<2x4x256xf32, #tpu.memory_space<vmem>>, vector<1x4x256xf32>
    %80 = vector.shape_cast %79 : vector<1x4x256xf32> to vector<4x256xf32>
    %81 = vector.shape_cast %77 : vector<4x256xf32> to vector<1x4x256xf32>
    tpu.vector_store %arg4[%78, %c0_27, %c0_28], %81 {strides = array<i32>} : memref<2x4x256xf32, #tpu.memory_space<vmem>>, vector<1x4x256xf32>,
    %c2_i32_29 = arith.constant 2 : i32
    return
  }
  func.func @transform_0(%arg0: i32) -> (i32, i32, i32) {
    %c0_i32 = arith.constant 0 : i32
    %c0_i32_0 = arith.constant 0 : i32
    %c0_i32_1 = arith.constant 0 : i32
    return %c0_i32, %arg0, %c0_i32_0 : i32, i32, i32
  }
  func.func @transform_1(%arg0: i32) -> (i32, i32) {
    %c0_i32 = arith.constant 0 : i32
    %c0_i32_0 = arith.constant 0 : i32
    return %arg0, %c0_i32 : i32, i32
  }
  func.func @transform_2(%arg0: i32) -> (i32, i32) {
    %c0_i32 = arith.constant 0 : i32
    %c0_i32_0 = arith.constant 0 : i32
    return %arg0, %c0_i32 : i32, i32
  }
  func.func @transform_3(%arg0: i32) -> (i32, i32, i32) {
    %c0_i32 = arith.constant 0 : i32
    %c0_i32_0 = arith.constant 0 : i32
    %c0_i32_1 = arith.constant 0 : i32
    return %c0_i32, %arg0, %c0_i32_0 : i32, i32, i32
  }
}

</mosaic_0001>

<llo_original>
// kernel: tpu_custom_call.1
$region0: #{tpu_custom_call.1}
  #allocation0 [shape = 'u32[]', space=smem, size = 0x4, offset = 0x4, fixed_abs, tag = 'smem constant byte address 0x4 - core index']
  #allocation1 [shape = 'u32[144,128]{1,0:T(1,128)}', space=vmem, size = 0x12000, scoped, tag = 'internal scratch']
  %s0 = inlined_call_operand.hbm [shape: f32[2,4,256], index: 0, kind: input, shape index: {}]
  %s1 = inlined_call_operand.vmem [shape: f32[4,2], index: 1, kind: input, shape index: {}]
  %s2 = inlined_call_operand.vmem [shape: f32[4,2], index: 2, kind: input, shape index: {}]
  %s3 = inlined_call_operand.hbm [shape: f32[2,4,256], index: 3, kind: output, shape index: {}]
  %s4 = sld [smem:[#allocation0]]
  $region26: #{tpu_custom_call.1} parent=0
    _
  %s6 = ssub.s32 1, %s4
  %s7 = scalar_select 0, %s6, %s4
  $region1: #{tpu_custom_call.1} parent=0
    #allocation2 [shape = 'u8[8192]{0}', space=vmem, size = 0x2000, scoped, tag = 'input window, operand 0, single buffered']
    #allocation3 [shape = 's32[1]{0}', space=sflag, size = 0x4, scoped, tag = 'scoped memory for tpu_custom_call.1']
    #allocation4 [shape = 's32[1]{0}', space=sflag, size = 0x4, scoped, tag = 'scoped memory for tpu_custom_call.1']
    #allocation5 [shape = 'u8[8192]{0}', space=vmem, size = 0x2000, scoped, tag = 'output window, operand 0, single buffered']
    %8 = vsyncpa [#allocation3], 0
    %9 = vsyncpa [#allocation4], 0
    // Predicated region
    $region2: #{tpu_custom_call.1} parent=1 // pred_check
      _
    $region3: #{tpu_custom_call.1} parent=1 // pred_check_branch
      %11 = sbr.rel (0) target = $region5
    $region4: #{tpu_custom_call.1} parent=1 // pred_region
      %s13 = ssub.s32 256, 256
      %14 = vsyncadd [#allocation3], %s13
      %s15 = sshll.u32 [#allocation2], 4
      %s16 = int_to_ptr.vmem [resolvable:$true] %s15
      %21 = dma.hbm_to_vmem [thread:$0]  %s0, 256, %s16, [#allocation3], 128, 128, 8
    $region5: #{tpu_custom_call.1} parent=1 // pred_fallthru
      _
    // Predicated region
    $region6: #{tpu_custom_call.1} parent=1 // pred_check
      _
    $region7: #{tpu_custom_call.1} parent=1 // pred_check_branch
      %23 = sbr.rel (0) target = $region9
    $region8: #{tpu_custom_call.1} parent=1 // pred_region
      _
    $region9: #{tpu_custom_call.1} parent=1 // pred_fallthru
      _
    // Predicated region
    $region10: #{tpu_custom_call.1} parent=1 // pred_check
      _
    $region11: #{tpu_custom_call.1} parent=1 // pred_check_branch
      %25 = sbr.rel (0) target = $region13
    $region12: #{tpu_custom_call.1} parent=1 // pred_region
      _
    $region13: #{tpu_custom_call.1} parent=1 // pred_fallthru
      _
    // Predicated region
    $region14: #{tpu_custom_call.1} parent=1 // pred_check
      _
    $region15: #{tpu_custom_call.1} parent=1 // pred_check_branch
      %27 = sbr.rel (0) target = $region17
    $region16: #{tpu_custom_call.1} parent=1 // pred_region
      %28 = dma.done [#allocation3], 256
    $region17: #{tpu_custom_call.1} parent=1 // pred_fallthru
      _
    %v29 = vld [vmem:[#allocation2] sm:$0xff]
    %v31 = vcombine.high %v29, %v29
    %vm33 = vcmask 1043456
    %v34 = vsel %vm33, %v29, 0.0
    %v35 = vsel %vm33, %v31, 0.0
    %v36 = vadd.f32 %v34, %v35
    %37 = vadd.xlane.f32.xlu0 %v36
    %v38 = vpop.xlane.xlu0 %37
    %v39 = vadd.f32 %v38, 0.0
    %v40 = vmul.f32 %v29, %v29
    %v42 = vcombine.high %v40, %v40
    %v44 = vsel %vm33, %v40, 0.0
    %v45 = vsel %vm33, %v42, 0.0
    %v46 = vadd.f32 %v44, %v45
    %47 = vadd.xlane.f32.xlu0 %v46
    %v48 = vpop.xlane.xlu0 %47
    %v49 = vadd.f32 %v48, 0.0
    %s50 = scalar_lea.vmem [#allocation2], 8
    %v51 = vld [vmem:[%s50] sm:$0xff]
    %v53 = vcombine.high %v51, %v51
    %v55 = vsel %vm33, %v51, 0.0
    %v56 = vsel %vm33, %v53, 0.0
    %v57 = vadd.f32 %v55, %v56
    %58 = vadd.xlane.f32.xlu0 %v57
    %v59 = vpop.xlane.xlu0 %58
    %v60 = vadd.f32 %v39, %v59
    %v61 = vmul.f32 %v51, %v51
    %v63 = vcombine.high %v61, %v61
    %v65 = vsel %vm33, %v61, 0.0
    %v66 = vsel %vm33, %v63, 0.0
    %v67 = vadd.f32 %v65, %v66
    %68 = vadd.xlane.f32.xlu0 %v67
    %v69 = vpop.xlane.xlu0 %68
    %v70 = vadd.f32 %v49, %v69
    %v71 = vmul.f32 %v60, 0.001953125
    %v72 = vmul.f32 %v70, 0.001953125
    %v73 = vmul.f32 %v71, %v71
    %v74 = vsub.f32 %v72, %v73
    %v75 = vmax.f32 %v74, 0.0
    %v76 = vadd.f32 %v75, 2e-05
    %v77 = vrsqrt.pop %v76
    %v78 = vld [vmem:[%s1] sm:$0xf]
    %v79 = vld [vmem:[%s2] sm:$0xf]
    %v80 = vmul.f32 %v78, %v77
    %v81 = vmul.f32 %v71, %v80
    %v82 = vsub.f32 %v79, %v81
    %v83 = vlaneseq
    %v84 = vand.u32 %v83, 127
    %vm85 = vcmp.eq.s32.totalorder %v84, 0
    %v86 = vsel %vm85, 1, 0
    %v87 = vcvt.s32.f32 %v86
    %v88 = vmul.f32 %v80, %v87
    %vm89 = vcmask 11264
    %v90 = vsel %vm89, %v88, 0.0
    %91 = vadd.xlane.f32.xlu0 %v90
    %v92 = vpop.xlane.xlu0 %91
    %v93 = vmul.f32 %v82, %v87
    %v94 = vsel %vm89, %v93, 0.0
    %95 = vadd.xlane.f32.xlu0 %v94
    %v96 = vpop.xlane.xlu0 %95
    %v99 = vunpack.c.l.s4 839922192
    %v100 = vunpack.c.0.s8 %v99
    %v101 = vlaneseq
    %v102 = vshrl.u32 %v101, 7
    %v103 = vsub.s32 %v100, %v102
    %v104 = vrot.slane %v92, %v103
    %v106 = vmul.f32 %v29, %v104
    %v109 = vunpack.c.l.s4 839922192
    %v110 = vunpack.c.0.s8 %v109
    %v111 = vlaneseq
    %v112 = vshrl.u32 %v111, 7
    %v113 = vsub.s32 %v110, %v112
    %v114 = vrot.slane %v96, %v113
    %v116 = vadd.f32 %v106, %v114
    %117 = vst [vmem:[#allocation5] sm:$0xff] %v116
    %vm118 = vcmp.eq.s32.totalorder %v84, 1
    %v119 = vsel %vm118, 1, 0
    %v120 = vcvt.s32.f32 %v119
    %v121 = vmul.f32 %v80, %v120
    %v122 = vsel %vm89, %v121, 0.0
    %123 = vadd.xlane.f32.xlu0 %v122
    %v124 = vpop.xlane.xlu0 %123
    %v125 = vmul.f32 %v82, %v120
    %v126 = vsel %vm89, %v125, 0.0
    %127 = vadd.xlane.f32.xlu0 %v126
    %v128 = vpop.xlane.xlu0 %127
    %v129 = vld [vmem:[%s50] sm:$0xff]
    %v132 = vunpack.c.l.s4 839922192
    %v133 = vunpack.c.0.s8 %v132
    %v134 = vlaneseq
    %v135 = vshrl.u32 %v134, 7
    %v136 = vsub.s32 %v133, %v135
    %v137 = vrot.slane %v124, %v136
    %v139 = vmul.f32 %v129, %v137
    %v142 = vunpack.c.l.s4 839922192
    %v143 = vunpack.c.0.s8 %v142
    %v144 = vlaneseq
    %v145 = vshrl.u32 %v144, 7
    %v146 = vsub.s32 %v143, %v145
    %v147 = vrot.slane %v128, %v146
    %v149 = vadd.f32 %v139, %v147
    %s150 = scalar_lea.vmem [#allocation5], 8
    %151 = vst [vmem:[%s150] sm:$0xff] %v149
    // Predicated region
    $region18: #{tpu_custom_call.1} parent=1 // pred_check
      _
    $region19: #{tpu_custom_call.1} parent=1 // pred_check_branch
      %153 = sbr.rel (0) target = $region21
    $region20: #{tpu_custom_call.1} parent=1 // pred_region
      %s155 = ssub.s32 256, 256
      %156 = vsyncadd [#allocation4], %s155
      %s157 = sshll.u32 [#allocation5], 4
      %s158 = int_to_ptr.vmem [resolvable:$true] %s157
      %163 = dma.vmem_to_hbm [thread:$0]  %s158, 256, %s3, [#allocation4], 128, 128, 8
    $region21: #{tpu_custom_call.1} parent=1 // pred_fallthru
      _
    // Predicated region
    $region22: #{tpu_custom_call.1} parent=1 // pred_check
      _
    $region23: #{tpu_custom_call.1} parent=1 // pred_check_branch
      %165 = sbr.rel (0) target = $region25
    $region24: #{tpu_custom_call.1} parent=1 // pred_region
      %166 = dma.done [#allocation4], 256
    $region25: #{tpu_custom_call.1} parent=1 // pred_fallthru
      _
    %167 = vsyncpa [#allocation3], 1
    %168 = vsyncpa [#allocation4], 1

</llo_original>
